<compile_context>
chip_gen: v7x
topology: tpu7x:2x2x1
jax: 0.10.0
libtpu: 0.0.40
codegen_flags: <defaults>
</compile_context>

<pallas_src>
import jax
import jax.numpy as jnp
from jax import lax
from jax.experimental import pallas as pl
from jax.experimental.pallas import tpu as pltpu


_LANES = 128
_SUBLANES = 8
_MAX_TILE_ROWS = 4096  # (4096, 128) f32 block = 2 MiB per input per pipeline buffer


def _round_up(x: int, m: int) -> int:
    return (x + m - 1) // m * m


def _make_kernel(groups_per_tile: int, tiles_per_split: int,
                 n_valid: int, n_padded: int):
    needs_mask = n_padded != n_valid

    def kernel(x_ref, y_ref, o_ref, acc_ref):
        p = pl.program_id(0)  # parallel (megacore) axis
        i = pl.program_id(1)  # sequential reduction axis

        @pl.when(i == 0)
        def _():
            acc_ref[...] = jnp.zeros_like(acc_ref)

        # Upcast in-kernel (keeps HBM traffic at the caller's dtype, e.g. bf16).
        x = (x_ref[...].astype(jnp.float32) + 1.0) * 0.5
        y = (y_ref[...].astype(jnp.float32) + 1.0) * 0.5
        # Numerically-stable BCE-with-logits, elementwise.  exp / log1p go to
        # the EUP slot; max / mul / sub are VPU — all hidden under HBM traffic.
        loss = jnp.maximum(x, 0.0) - x * y + jnp.log1p(jnp.exp(-jnp.abs(x)))

        if needs_mask:
            # Zero out the contribution of padded elements (flat index >= n_valid).
            shape = (groups_per_tile, _SUBLANES, _LANES)
            base_group = (p * tiles_per_split + i) * groups_per_tile
            g_ids = lax.broadcasted_iota(jnp.int32, shape, 0)
            s_ids = lax.broadcasted_iota(jnp.int32, shape, 1)
            l_ids = lax.broadcasted_iota(jnp.int32, shape, 2)
            flat = ((base_group + g_ids) * _SUBLANES + s_ids) * _LANES + l_ids
            loss = jnp.where(flat < n_valid, loss, 0.0)

        # VPU-only partial reduction into a vreg-shaped (8,128) accumulator.
        acc_ref[...] += jnp.sum(loss, axis=0)

        @pl.when(i == pl.num_programs(1) - 1)
        def _():
            o_ref[...] = acc_ref[...]

    return kernel


def bce_with_logits_loss_pn_one(inp: jax.Array, tgt: jax.Array) -> jax.Array:
    """Mean BCEWithLogitsLoss over (input+1)/2 vs (target+1)/2."""
    assert inp.shape == tgt.shape
    n_valid = int(inp.size)

    # Lane-dense layout: (groups, 8, 128).
    rows_needed = pl.cdiv(n_valid, _LANES)

    # Megacore / v7x: split the row range across 2 cores when big enough.
    num_splits = 2 if rows_needed >= 2 * _SUBLANES else 1

    rows_per_split = pl.cdiv(rows_needed, num_splits)
    tile_rows = min(_MAX_TILE_ROWS, _round_up(rows_per_split, _SUBLANES))
    tiles_per_split = pl.cdiv(rows_needed, num_splits * tile_rows)
    rows_padded = num_splits * tiles_per_split * tile_rows
    n_padded = rows_padded * _LANES

    groups_per_tile = tile_rows // _SUBLANES
    groups_total = rows_padded // _SUBLANES

    def to_slab(a):
        flat = a.reshape(-1)
        if n_padded != n_valid:
            # Pad with zeros; padded elements are masked inside the kernel.
            flat = jnp.pad(flat, (0, n_padded - n_valid))
        return flat.reshape(groups_total, _SUBLANES, _LANES)

    x3d = to_slab(inp)
    y3d = to_slab(tgt)

    block = (groups_per_tile, _SUBLANES, _LANES)
    in_map = lambda p, i: (p * tiles_per_split + i, 0, 0)

    partials = pl.pallas_call(
        _make_kernel(groups_per_tile, tiles_per_split, n_valid, n_padded),
        out_shape=jax.ShapeDtypeStruct((num_splits * _SUBLANES, _LANES), jnp.float32),
        grid_spec=pltpu.PrefetchScalarGridSpec(
            num_scalar_prefetch=0,
            grid=(num_splits, tiles_per_split),
            in_specs=[
                pl.BlockSpec(block, in_map),
                pl.BlockSpec(block, in_map),
            ],
            out_specs=pl.BlockSpec((_SUBLANES, _LANES), lambda p, i: (p, 0)),
            scratch_shapes=[pltpu.VMEM((_SUBLANES, _LANES), jnp.float32)],
        ),
        compiler_params=pltpu.CompilerParams(
            dimension_semantics=("parallel", "arbitrary"),
            vmem_limit_bytes=32 * 1024 * 1024,
        ),
    )(x3d, y3d)

    # Tiny final cross-lane reduction + mean normalization in plain XLA.
    return jnp.sum(partials) / jnp.float32(n_valid)


if __name__ == "__main__":
    key = jax.random.PRNGKey(0)
    k1, k2 = jax.random.split(key)

    # Small NCHW-like shapes consistent with an image-loss use case.
    B, C, H, W = 2, 4, 16, 16
    inp = jax.random.normal(k1, (B, C, H, W), dtype=jnp.float32)
    # targets in {-1, +1}
    tgt = jnp.where(
        jax.random.uniform(k2, (B, C, H, W)) > 0.5, 1.0, -1.0
    ).astype(jnp.float32)

    loss = bce_with_logits_loss_pn_one(inp, tgt)
    jax.block_until_ready(loss)

    # Pure-JAX reference check (same stable formula, mean reduction).
    x = (inp + 1.0) * 0.5
    y = (tgt + 1.0) * 0.5
    ref = jnp.mean(jnp.maximum(x, 0.0) - x * y + jnp.log1p(jnp.exp(-jnp.abs(x))))
    assert jnp.allclose(loss, ref, atol=1e-5, rtol=1e-5), (loss, ref)

    print("KERNEL_OK")
</pallas_src>

<mosaic_0001>
module attributes {stable_mosaic.version = 11 : i64} {
  func.func @kernel(%arg0: i32, %arg1: i32, %arg2: memref<1x8x128xf32, #tpu.memory_space<vmem>>, %arg3: memref<1x8x128xf32, #tpu.memory_space<vmem>>, %arg4: memref<8x128xf32, #tpu.memory_space<vmem>>, %arg5: memref<8x128xf32, #tpu.memory_space<vmem>>) attributes {dimension_semantics = [#tpu.dimension_semantics<parallel>, #tpu.dimension_semantics<arbitrary>], iteration_bounds = array<i64: 2, 1>, scalar_prefetch = 0 : i64, scratch_operands = 1 : i64, tpu.core_type = #tpu.core_type<tc>, window_params = [{transform_indices = @transform_0, window_bounds = array<i64: 1, 8, 128>}, {transform_indices = @transform_1, window_bounds = array<i64: 1, 8, 128>}, {transform_indices = @transform_2, window_bounds = array<i64: 8, 128>}]} {
    %c0_i32 = arith.constant 0 : i32
    %0 = arith.cmpi eq, %arg1, %c0_i32 : i32
    %1 = arith.extui %0 : i1 to i32
    %c0_i32_0 = arith.constant 0 : i32
    %2 = arith.cmpi ne, %1, %c0_i32_0 : i32
    scf.if %2 {
      %cst_18 = arith.constant 0.000000e+00 : f32
      %30 = vector.broadcast %cst_18 : f32 to vector<8x128xf32>
      %c0_19 = arith.constant 0 : index
      %c0_20 = arith.constant 0 : index
      %31 = vector.load %arg5[%c0_19, %c0_20] : memref<8x128xf32, #tpu.memory_space<vmem>>, vector<8x128xf32>
      tpu.vector_store %arg5[%c0_19, %c0_20], %30 {strides = array<i32>} : memref<8x128xf32, #tpu.memory_space<vmem>>, vector<8x128xf32>,
    } else {
    }
    %c0 = arith.constant 0 : index
    %c0_1 = arith.constant 0 : index
    %c0_2 = arith.constant 0 : index
    %3 = vector.load %arg2[%c0, %c0_1, %c0_2] : memref<1x8x128xf32, #tpu.memory_space<vmem>>, vector<1x8x128xf32>
    %cst = arith.constant 1.000000e+00 : f32
    %4 = vector.broadcast %cst : f32 to vector<1x8x128xf32>
    %5 = arith.addf %3, %4 : vector<1x8x128xf32>
    %cst_3 = arith.constant 5.000000e-01 : f32
    %6 = vector.broadcast %cst_3 : f32 to vector<1x8x128xf32>
    %7 = arith.mulf %5, %6 : vector<1x8x128xf32>
    %c0_4 = arith.constant 0 : index
    %c0_5 = arith.constant 0 : index
    %c0_6 = arith.constant 0 : index
    %8 = vector.load %arg3[%c0_4, %c0_5, %c0_6] : memref<1x8x128xf32, #tpu.memory_space<vmem>>, vector<1x8x128xf32>
    %cst_7 = arith.constant 1.000000e+00 : f32
    %9 = vector.broadcast %cst_7 : f32 to vector<1x8x128xf32>
    %10 = arith.addf %8, %9 : vector<1x8x128xf32>
    %cst_8 = arith.constant 5.000000e-01 : f32
    %11 = vector.broadcast %cst_8 : f32 to vector<1x8x128xf32>
    %12 = arith.mulf %10, %11 : vector<1x8x128xf32>
    %cst_9 = arith.constant 0.000000e+00 : f32
    %13 = vector.broadcast %cst_9 : f32 to vector<1x8x128xf32>
    %14 = arith.maximumf %7, %13 : vector<1x8x128xf32>
    %15 = arith.mulf %7, %12 : vector<1x8x128xf32>
    %16 = arith.subf %14, %15 : vector<1x8x128xf32>
    %17 = math.absf %7 : vector<1x8x128xf32>
    %cst_10 = arith.constant 0.000000e+00 : f32
    %18 = vector.broadcast %cst_10 : f32 to vector<1x8x128xf32>
    %19 = arith.subf %18, %17 : vector<1x8x128xf32>
    %20 = math.exp %19 : vector<1x8x128xf32>
    %21 = math.log1p %20 : vector<1x8x128xf32>
    %22 = arith.addf %16, %21 : vector<1x8x128xf32>
    %c0_11 = arith.constant 0 : index
    %c0_12 = arith.constant 0 : index
    %23 = vector.load %arg5[%c0_11, %c0_12] : memref<8x128xf32, #tpu.memory_space<vmem>>, vector<8x128xf32>
    %cst_13 = arith.constant dense<0.000000e+00> : vector<8x128xf32>
    %24 = vector.multi_reduction <add>, %22, %cst_13 [0] : vector<1x8x128xf32> to vector<8x128xf32>
    %25 = arith.addf %23, %24 : vector<8x128xf32>
    %c0_14 = arith.constant 0 : index
    %c0_15 = arith.constant 0 : index
    %26 = vector.load %arg5[%c0_14, %c0_15] : memref<8x128xf32, #tpu.memory_space<vmem>>, vector<8x128xf32>
    tpu.vector_store %arg5[%c0_14, %c0_15], %25 {strides = array<i32>} : memref<8x128xf32, #tpu.memory_space<vmem>>, vector<8x128xf32>,
    %c0_i32_16 = arith.constant 0 : i32
    %27 = arith.cmpi eq, %arg1, %c0_i32_16 : i32
    %28 = arith.extui %27 : i1 to i32
    %c0_i32_17 = arith.constant 0 : i32
    %29 = arith.cmpi ne, %28, %c0_i32_17 : i32
    scf.if %29 {
      %c0_18 = arith.constant 0 : index
      %c0_19 = arith.constant 0 : index
      %30 = vector.load %arg5[%c0_18, %c0_19] : memref<8x128xf32, #tpu.memory_space<vmem>>, vector<8x128xf32>
      %c0_20 = arith.constant 0 : index
      %c0_21 = arith.constant 0 : index
      %31 = vector.load %arg4[%c0_20, %c0_21] : memref<8x128xf32, #tpu.memory_space<vmem>>, vector<8x128xf32>
      tpu.vector_store %arg4[%c0_20, %c0_21], %30 {strides = array<i32>} : memref<8x128xf32, #tpu.memory_space<vmem>>, vector<8x128xf32>,
    } else {
    }
    return
  }
  func.func @transform_0(%arg0: i32, %arg1: i32) -> (i32, i32, i32) {
    %c1_i32 = arith.constant 1 : i32
    %0 = arith.muli %arg0, %c1_i32 : i32
    %1 = arith.addi %0, %arg1 : i32
    %c0_i32 = arith.constant 0 : i32
    %c0_i32_0 = arith.constant 0 : i32
    %c0_i32_1 = arith.constant 0 : i32
    return %1, %c0_i32, %c0_i32_0 : i32, i32, i32
  }
  func.func @transform_1(%arg0: i32, %arg1: i32) -> (i32, i32, i32) {
    %c1_i32 = arith.constant 1 : i32
    %0 = arith.muli %arg0, %c1_i32 : i32
    %1 = arith.addi %0, %arg1 : i32
    %c0_i32 = arith.constant 0 : i32
    %c0_i32_0 = arith.constant 0 : i32
    %c0_i32_1 = arith.constant 0 : i32
    return %1, %c0_i32, %c0_i32_0 : i32, i32, i32
  }
  func.func @transform_2(%arg0: i32, %arg1: i32) -> (i32, i32) {
    %c0_i32 = arith.constant 0 : i32
    %c0_i32_0 = arith.constant 0 : i32
    return %arg0, %c0_i32 : i32, i32
  }
}

</mosaic_0001>

<llo_original>
// kernel: tpu_custom_call.1
$region0: #{tpu_custom_call.1}
  #allocation0 [shape = 'u32[]', space=smem, size = 0x4, offset = 0x4, fixed_abs, tag = 'smem constant byte address 0x4 - core index']
  #allocation1 [shape = 'u32[144,128]{1,0:T(1,128)}', space=vmem, size = 0x12000, scoped, tag = 'internal scratch']
  #allocation2 [shape = 'f32[8,128]{1,0:T(8,128)}', space=vmem, size = 0x1000, scoped, tag = 'scratch operand']
  %s0 = inlined_call_operand.hbm [shape: f32[2,8,128], index: 0, kind: input, shape index: {}]
  %s1 = inlined_call_operand.hbm [shape: f32[2,8,128], index: 1, kind: input, shape index: {}]
  %s2 = inlined_call_operand.hbm [shape: f32[16,128], index: 2, kind: output, shape index: {}]
  %s3 = sld [smem:[#allocation0]]
  $region57: #{tpu_custom_call.1} parent=0
    _
  %s5 = ssub.s32 1, %s3
  %s6 = scalar_select 0, %s5, %s3
  $region1: #{tpu_custom_call.1} parent=0
    #allocation3 [shape = 'u8[8192]{0}', space=vmem, size = 0x2000, scoped, tag = 'input window, operand 0']
    #allocation4 [shape = 's32[2]{0}', space=sflag, size = 0x8, scoped, tag = 'scoped memory for tpu_custom_call.1']
    #allocation5 [shape = 's32[2]{0}', space=sflag, size = 0x8, scoped, tag = 'scoped memory for tpu_custom_call.1']
    #allocation6 [shape = 'u8[8192]{0}', space=vmem, size = 0x2000, scoped, tag = 'input window, operand 1']
    #allocation7 [shape = 's32[2]{0}', space=sflag, size = 0x8, scoped, tag = 'scoped memory for tpu_custom_call.1']
    #allocation8 [shape = 'u8[8192]{0}', space=vmem, size = 0x2000, scoped, tag = 'output window, operand 0']
    %7 = vsyncpa [#allocation4], 0
    %s8 = scalar_lea.sflag [#allocation4], 1
    %9 = vsyncpa %s8, 0
    %10 = vsyncpa [#allocation7], 0
    %s11 = scalar_lea.sflag [#allocation7], 1
    %12 = vsyncpa %s11, 0
    %13 = vsyncpa [#allocation5], 0
    %s14 = scalar_lea.sflag [#allocation5], 1
    %15 = vsyncpa %s14, 0
    loop: start=0, step=1, limit=4
    $region2: #{tpu_custom_call.1} parent=1 // loop_pre_header
      _
    $region3: #{tpu_custom_call.1} parent=1 // loop_header
      %s17 = sphi 0, %s21
      %p18 = scmp.ge.s32.totalorder %s17, 4
      %s24 = sphi 0, %s36
      %s25 = sphi 0, %s32
      %s26 = sphi 0, %s24
      %s27 = sphi 0, %s25
      %s28 = sphi 0, %s26
      %s29 = sphi 0, %s27
      %s41 = sphi 0, %s43
      %s44 = sphi 0, %s41
      %s45 = sphi 0, %s44
      %s61 = sphi 0, %s45
      %s69 = sphi 0, %s71
      %s72 = sphi 0, %s69
      %s73 = sphi 0, %s72
      %s89 = sphi 0, %s73
      %s95 = sphi 0, %s97
      %s98 = sphi 0, %s95
      %s99 = sphi 0, %s98
      %s115 = sphi 0, %s99
    $region4: #{tpu_custom_call.1} parent=1 // loop_header_branch
      %20 = sbr.rel (%p18) target = $region8
    $region5: #{tpu_custom_call.1} parent=1 // loop_body
      %s22 = ssub.s32 %s17, 1
      %s23 = ssub.s32 %s17, 2
      %s30 = sadd.s32 1, %s25
      %p31 = scmp.ge.s32.totalorder %s30, 1
      %s32 = scalar_select %p31, 0, %s30
      %s33 = sadd.s32 1, %s24
      %s34 = scalar_select %p31, %s33, %s24
      %p35 = scmp.ge.s32.totalorder %s34, 2
      %s36 = scalar_select %p35, 0, %s34
      %s37 = sadd.s32 %s24, %s25
      %s38 = sadd.s32 %s36, %s32
      %s39 = ssub.s32 %s37, %s38
      %p40 = scmp.eq.s32.totalorder %s39, 0
      %s42 = sadd.s32 %s41, 1
      %s43 = scalar_select %p40, %s41, %s42
      %p46 = pneg %p40
      %p47 = scmp.eq.s32.totalorder %s17, 1
      %p48 = por %p46, %p47
      %p49 = scmp.ne.s32.totalorder %s41, %s44
      %p50 = scmp.eq.s32.totalorder %s17, 0
      %p51 = por %p49, %p50
      %p52 = scmp.ne.s32.totalorder %s41, %s44
      %p53 = scmp.eq.s32.totalorder %s22, 1
      %p54 = por %p52, %p53
      %p55 = scmp.ne.s32.totalorder %s44, %s45
      %p56 = scmp.eq.s32.totalorder %s22, 0
      %p57 = por %p55, %p56
      %p58 = scmp.ne.s32.totalorder %s44, %s45
      %p59 = scmp.eq.s32.totalorder %s23, 1
      %p60 = por %p58, %p59
      %p62 = scmp.ne.s32.totalorder %s45, %s61
      %p63 = scmp.eq.s32.totalorder %s23, 0
      %p64 = por %p62, %p63
      %s65 = sadd.s32 %s24, %s25
      %s66 = sadd.s32 %s36, %s32
      %s67 = ssub.s32 %s65, %s66
      %p68 = scmp.eq.s32.totalorder %s67, 0
      %s70 = sadd.s32 %s69, 1
      %s71 = scalar_select %p68, %s69, %s70
      %p74 = pneg %p68
      %p75 = scmp.eq.s32.totalorder %s17, 1
      %p76 = por %p74, %p75
      %p77 = scmp.ne.s32.totalorder %s69, %s72
      %p78 = scmp.eq.s32.totalorder %s17, 0
      %p79 = por %p77, %p78
      %p80 = scmp.ne.s32.totalorder %s69, %s72
      %p81 = scmp.eq.s32.totalorder %s22, 1
      %p82 = por %p80, %p81
      %p83 = scmp.ne.s32.totalorder %s72, %s73
      %p84 = scmp.eq.s32.totalorder %s22, 0
      %p85 = por %p83, %p84
      %p86 = scmp.ne.s32.totalorder %s72, %s73
      %p87 = scmp.eq.s32.totalorder %s23, 1
      %p88 = por %p86, %p87
      %p90 = scmp.ne.s32.totalorder %s73, %s89
      %p91 = scmp.eq.s32.totalorder %s23, 0
      %p92 = por %p90, %p91
      %s93 = ssub.s32 %s24, %s36
      %p94 = scmp.eq.s32.totalorder %s93, 0
      %s96 = sadd.s32 %s95, 1
      %s97 = scalar_select %p94, %s95, %s96
      %p100 = pneg %p94
      %p101 = scmp.eq.s32.totalorder %s17, 1
      %p102 = por %p100, %p101
      %p103 = scmp.ne.s32.totalorder %s95, %s98
      %p104 = scmp.eq.s32.totalorder %s17, 0
      %p105 = por %p103, %p104
      %p106 = scmp.ne.s32.totalorder %s95, %s98
      %p107 = scmp.eq.s32.totalorder %s22, 1
      %p108 = por %p106, %p107
      %p109 = scmp.ne.s32.totalorder %s98, %s99
      %p110 = scmp.eq.s32.totalorder %s22, 0
      %p111 = por %p109, %p110
      %p112 = scmp.ne.s32.totalorder %s98, %s99
      %p113 = scmp.eq.s32.totalorder %s23, 1
      %p114 = por %p112, %p113
      %p116 = scmp.ne.s32.totalorder %s99, %s115
      %p117 = scmp.eq.s32.totalorder %s23, 0
      %p118 = por %p116, %p117
      %p119 = scmp.le.s32.totalorder 1, %s17
      %p120 = scmp.lt.s32.totalorder %s17, 3
      %p121 = pnand %p119, %p120
      %p122 = pneg %p121
      // Predicated region
      $region9: #{tpu_custom_call.1} parent=5 // pred_check
        _
      $region10: #{tpu_custom_call.1} parent=5 // pred_check_branch
        %124 = sbr.rel (%p121) target = $region12
      $region11: #{tpu_custom_call.1} parent=5 // pred_region
        %s125 = ssub.s32 %s17, 1
      $region12: #{tpu_custom_call.1} parent=5 // pred_fallthru
        _
      %p126 = scmp.lt.s32.totalorder %s17, 2
      // Predicated region
      $region13: #{tpu_custom_call.1} parent=5 // pred_check
        %p127 = pneg %p126
      $region14: #{tpu_custom_call.1} parent=5 // pred_check_branch
        %129 = sbr.rel (%p127) target = $region16
      $region15: #{tpu_custom_call.1} parent=5 // pred_region
        // Predicated region
        $region17: #{tpu_custom_call.1} parent=15 // pred_check
          %p130 = pneg %p51
        $region18: #{tpu_custom_call.1} parent=15 // pred_check_branch
          %132 = sbr.rel (%p130) target = $region20
        $region19: #{tpu_custom_call.1} parent=15 // pred_region
          %s133 = sand.u32 %s41, 1
          %s134 = scalar_lea.sflag [#allocation4], %s133
          %s135 = sand.u32 %s41, 1
          %s136 = smul.addr %s135, 8
          %s137 = scalar_lea.vmem [#allocation3], %s136
          %s138 = sadd.s32 %s24, %s25
          %s140 = ssub.s32 128, 128
          %141 = vsyncadd %s134, %s140
          %s142 = smul.addr %s138, 128
          %s143 = scalar_lea.hbm %s0, %s142
          %s145 = sshll.u32 %s137, 4
          %s146 = int_to_ptr.vmem [resolvable:$true] %s145
          %148 = dma.hbm_to_vmem [thread:$0]  %s143, 128, %s146, %s134
        $region20: #{tpu_custom_call.1} parent=15 // pred_fallthru
          _
        // Predicated region
        $region21: #{tpu_custom_call.1} parent=15 // pred_check
          %p149 = pneg %p79
        $region22: #{tpu_custom_call.1} parent=15 // pred_check_branch
          %151 = sbr.rel (%p149) target = $region24
        $region23: #{tpu_custom_call.1} parent=15 // pred_region
          %s152 = sand.u32 %s69, 1
          %s153 = scalar_lea.sflag [#allocation7], %s152
          %s154 = sand.u32 %s69, 1
          %s155 = smul.addr %s154, 8
          %s156 = scalar_lea.vmem [#allocation6], %s155
          %s157 = sadd.s32 %s24, %s25
          %s159 = ssub.s32 128, 128
          %160 = vsyncadd %s153, %s159
          %s161 = smul.addr %s157, 128
          %s162 = scalar_lea.hbm %s1, %s161
          %s164 = sshll.u32 %s156, 4
          %s165 = int_to_ptr.vmem [resolvable:$true] %s164
          %167 = dma.hbm_to_vmem [thread:$0]  %s162, 128, %s165, %s153
        $region24: #{tpu_custom_call.1} parent=15 // pred_fallthru
          _
      $region16: #{tpu_custom_call.1} parent=5 // pred_fallthru
        _
      %p168 = scmp.le.s32.totalorder 1, %s17
      %p169 = scmp.lt.s32.totalorder %s17, 3
      %p170 = pnand %p168, %p169
      %p171 = pneg %p170
      // Predicated region
      $region25: #{tpu_custom_call.1} parent=5 // pred_check
        _
      $region26: #{tpu_custom_call.1} parent=5 // pred_check_branch
        %173 = sbr.rel (%p170) target = $region28
      $region27: #{tpu_custom_call.1} parent=5 // pred_region
        %s174 = ssub.s32 %s17, 1
        %s175 = sand.u32 %s44, 1
        %s176 = scalar_lea.sflag [#allocation4], %s175
        %s177 = sand.u32 %s44, 1
        %s178 = smul.addr %s177, 8
        %s179 = scalar_lea.vmem [#allocation3], %s178
        // Predicated region
        $region29: #{tpu_custom_call.1} parent=27 // pred_check
          %p180 = pneg %p57
        $region30: #{tpu_custom_call.1} parent=27 // pred_check_branch
          %182 = sbr.rel (%p180) target = $region32
        $region31: #{tpu_custom_call.1} parent=27 // pred_region
          %183 = dma.done %s176, 128
        $region32: #{tpu_custom_call.1} parent=27 // pred_fallthru
          _
        %s184 = sand.u32 %s72, 1
        %s185 = scalar_lea.sflag [#allocation7], %s184
        %s186 = sand.u32 %s72, 1
        %s187 = smul.addr %s186, 8
        %s188 = scalar_lea.vmem [#allocation6], %s187
        // Predicated region
        $region33: #{tpu_custom_call.1} parent=27 // pred_check
          %p189 = pneg %p85
        $region34: #{tpu_custom_call.1} parent=27 // pred_check_branch
          %191 = sbr.rel (%p189) target = $region36
        $region35: #{tpu_custom_call.1} parent=27 // pred_region
          %192 = dma.done %s185, 128
        $region36: #{tpu_custom_call.1} parent=27 // pred_fallthru
          _
        %s193 = sand.u32 %s44, 1
        %s194 = scalar_lea.sflag [#allocation4], %s193
        %s195 = sand.u32 %s44, 1
        %s196 = smul.addr %s195, 8
        %s197 = scalar_lea.vmem [#allocation3], %s196
        %p198 = pneg %p57
        %p199 = pneg %p54
        %s200 = sand.u32 %s72, 1
        %s201 = scalar_lea.sflag [#allocation7], %s200
        %s202 = sand.u32 %s72, 1
        %s203 = smul.addr %s202, 8
        %s204 = scalar_lea.vmem [#allocation6], %s203
        %p205 = pneg %p85
        %p206 = pneg %p82
        %p207 = pneg %p111
        %p208 = pneg %p108
        %s209 = sand.u32 %s98, 1
        %s210 = scalar_lea.sflag [#allocation5], %s209
        %s211 = sand.u32 %s98, 1
        %s212 = smul.addr %s211, 8
        %s213 = scalar_lea.vmem [#allocation8], %s212
        %s214 = sadd.s32 %s26, %s27
        %s215 = sadd.s32 %s26, %s27
        %p216 = scmp.eq.s32.totalorder %s27, 0
        // Predicated region
        $region37: #{tpu_custom_call.1} parent=27 // pred_check
          %p217 = pneg %p216
        $region38: #{tpu_custom_call.1} parent=27 // pred_check_branch
          %219 = sbr.rel (%p217) target = $region40
        $region39: #{tpu_custom_call.1} parent=27 // pred_region
          %220 = vst [vmem:[#allocation2] sm:$0xff] 0.0
        $region40: #{tpu_custom_call.1} parent=27 // pred_fallthru
          _
        %v221 = vld [vmem:[%s179] sm:$0xff]
        %v222 = vadd.f32 %v221, 1.0
        %v223 = vmul.f32 %v222, 0.5
        %v224 = vld [vmem:[%s188] sm:$0xff]
        %v225 = vadd.f32 %v224, 1.0
        %v226 = vmul.f32 %v225, 0.5
        %v227 = vmax.f32 %v223, 0.0
        %v228 = vmul.f32 %v223, %v226
        %v229 = vsub.f32 %v227, %v228
        %v230 = vand.u32 2147483647, %v223
        %v231 = vsub.f32 0.0, %v230
        %v232 = vmul.f32 %v231, 1.442695
        %v233 = vpow.pop %v232
        %v234 = vadd.f32 %v233, 1.0
        %v235 = vlog2.pop %v234
        %v236 = vmul.f32 %v235, 0.6931472
        %v237 = vmul.f32 -0.5, %v233
        %v238 = vadd.f32 %v237, 1.0
        %v239 = vmul.f32 %v238, %v233
        %v240 = vand.u32 2147483647, %v233
        %vm241 = vcmp.lt.f32.partialorder %v240, 0.0004427343
        %v242 = vsel %vm241, %v239, %v236
        %v243 = vadd.f32 %v229, %v242
        %v244 = vld [vmem:[#allocation2] sm:$0xff]
        %v245 = vadd.f32 %v243, 0.0
        %v246 = vadd.f32 %v244, %v245
        %247 = vst [vmem:[#allocation2] sm:$0xff] %v246
        // Predicated region
        $region41: #{tpu_custom_call.1} parent=27 // pred_check
          %p248 = pneg %p216
        $region42: #{tpu_custom_call.1} parent=27 // pred_check_branch
          %250 = sbr.rel (%p248) target = $region44
        $region43: #{tpu_custom_call.1} parent=27 // pred_region
          %v251 = vld [vmem:[#allocation2] sm:$0xff]
          %252 = vst [vmem:[%s213] sm:$0xff] %v251
        $region44: #{tpu_custom_call.1} parent=27 // pred_fallthru
          _
        %s253 = sand.u32 %s98, 1
        %s254 = scalar_lea.sflag [#allocation5], %s253
        %s255 = sand.u32 %s98, 1
        %s256 = smul.addr %s255, 8
        %s257 = scalar_lea.vmem [#allocation8], %s256
        // Predicated region
        $region45: #{tpu_custom_call.1} parent=27 // pred_check
          %p258 = pneg %p108
        $region46: #{tpu_custom_call.1} parent=27 // pred_check_branch
          %260 = sbr.rel (%p258) target = $region48
        $region47: #{tpu_custom_call.1} parent=27 // pred_region
          %s262 = ssub.s32 128, 128
          %263 = vsyncadd %s254, %s262
          %s264 = smul.addr %s26, 128
          %s265 = scalar_lea.hbm %s2, %s264
          %s267 = sshll.u32 %s257, 4
          %s268 = int_to_ptr.vmem [resolvable:$true] %s267
          %270 = dma.vmem_to_hbm [thread:$0]  %s268, 128, %s265, %s254
        $region48: #{tpu_custom_call.1} parent=27 // pred_fallthru
          _
      $region28: #{tpu_custom_call.1} parent=5 // pred_fallthru
        _
      %p271 = scmp.le.s32.totalorder 2, %s17
      // Predicated region
      $region49: #{tpu_custom_call.1} parent=5 // pred_check
        %p272 = pneg %p271
      $region50: #{tpu_custom_call.1} parent=5 // pred_check_branch
        %274 = sbr.rel (%p272) target = $region52
      $region51: #{tpu_custom_call.1} parent=5 // pred_region
        %s275 = ssub.s32 %s17, 2
        // Predicated region
        $region53: #{tpu_custom_call.1} parent=51 // pred_check
          %p276 = pneg %p114
        $region54: #{tpu_custom_call.1} parent=51 // pred_check_branch
          %278 = sbr.rel (%p276) target = $region56
        $region55: #{tpu_custom_call.1} parent=51 // pred_region
          %s279 = sand.u32 %s99, 1
          %s280 = scalar_lea.sflag [#allocation5], %s279
          %s281 = sand.u32 %s99, 1
          %s282 = smul.addr %s281, 8
          %s283 = scalar_lea.vmem [#allocation8], %s282
          %284 = dma.done %s280, 128
        $region56: #{tpu_custom_call.1} parent=51 // pred_fallthru
          _
      $region52: #{tpu_custom_call.1} parent=5 // pred_fallthru
        _
    $region6: #{tpu_custom_call.1} parent=1 // loop_footer
      %s21 = sadd.s32 1, %s17
    $region7: #{tpu_custom_call.1} parent=1 // loop_footer_branch
      %16 = sbr.rel target = $region3
    $region8: #{tpu_custom_call.1} parent=1 // loop_exit
      _
    %285 = vsyncpa [#allocation4], 1
    %s286 = scalar_lea.sflag [#allocation4], 1
    %287 = vsyncpa %s286, 1
    %288 = vsyncpa [#allocation7], 1
    %s289 = scalar_lea.sflag [#allocation7], 1
    %290 = vsyncpa %s289, 1
    %291 = vsyncpa [#allocation5], 1
    %s292 = scalar_lea.sflag [#allocation5], 1
    %293 = vsyncpa %s292, 1

</llo_original>
